<compile_context>
chip_gen: v6e
topology: v6e:2x2x1
jax: 0.10.0
libtpu: 0.0.40
codegen_flags: <defaults>
</compile_context>

<pallas_src>
import jax
import jax.numpy as jnp
from jax.experimental import pallas as pl
from jax.experimental.pallas import tpu as pltpu

BN_EPS = 1e-5  # PyTorch BatchNorm1d default eps


def s_net_kernel(xt_ref, w1_ref, w2_ref, vec_ref, s_ref):
    """Fused forward on one lane-dense batch tile.

    xt_ref : (IN, TM)  x^T tile (batch in lanes), compute dtype (bf16 or f32)
    w1_ref : (H, IN)   BN1 + sigmoid-affine folded weight (compute dtype)
    w2_ref : (H, H)    BN2 + sigmoid-affine folded weight (compute dtype)
    vec_ref: (H, 4)    packed f32 columns [c1, c2, w3', b3']
    s_ref  : (1, TM)   lane-dense f32 output row, exp(l3(...))
    """
    cdt = xt_ref.dtype                                  # compute dtype
    c1 = vec_ref[:, 0:1]                                # (H, 1) f32
    c2 = vec_ref[:, 1:2]                                # (H, 1) f32
    w3 = vec_ref[:, 2:3]                                # (H, 1) f32
    b3 = vec_ref[0:1, 3:4]                              # (1, 1) f32

    # Layer 1: sigmoid(BN(l1 x)) == 0.5*(t1+1) with t1 = tanh(A1 x + c1);
    # the 0.5/+0.5 affine is pre-folded into the next layer's weights.
    z1 = jnp.dot(w1_ref[...], xt_ref[...],
                 preferred_element_type=jnp.float32) + c1      # f32 accumulate
    t1 = jnp.tanh(z1.astype(cdt))                              # EUP (bf16 on v6e/v7x)
    # TODO(synk): training-mode Dropout (p=0.25) is stochastic; eval semantics (identity) used.

    # Layer 2 (sigmoid affine of layer 1 and of this sigmoid already folded in).
    z2 = jnp.dot(w2_ref[...], t1,
                 preferred_element_type=jnp.float32) + c2
    t2 = jnp.tanh(z2.astype(cdt))

    # Layer 3 (output dim 1): VPU multiply + sublane (XLU) reduce, no N=1 MXU
    # matmul; exp only touches the (1, TM) row.
    z3 = jnp.sum(t2.astype(jnp.float32) * w3, axis=0, keepdims=True) + b3
    s_ref[...] = jnp.exp(z3)


def _round_up(a, b):
    return (a + b - 1) // b * b


def _pick_tm(n, device_kind):
    """Chip-aware lane-dense batch-tile size."""
    if n <= 1024:
        # Tiny batches: one small tile; a 1-step grid is pure launch overhead
        # anyway, so keep VMEM/pad cost minimal.
        return _round_up(max(n, 1), 128)
    if "v5" in device_kind:
        cap = 8192        # 16 MiB default scoped VMEM on v5e
    else:
        cap = 16384       # v6e (32 MiB scoped) / v7x (32 MiB scoped, 64 MiB phys)
    # Keep >= ~8 grid steps so v7x's two TensorCores stay balanced on the
    # "parallel" batch axis.
    tm = min(cap, _round_up(-(-n // 8), 128))
    return max(tm, 512)


def init_params(key, input_size, hidden_size):
    """Deterministic parameter init mirroring S_net.__init__ (PyTorch layouts)."""
    k1, k2, k3, kb1, kb2, kb3, k4 = jax.random.split(key, 7)

    def kaiming(k, out_f, in_f):  # torch kaiming_normal_, fan_in, gain=sqrt(2)
        std = (2.0 / in_f) ** 0.5
        return std * jax.random.normal(k, (out_f, in_f), jnp.float32)

    def linear_bias(k, in_f, out_f):  # torch default Linear bias init
        bound = 1.0 / (in_f ** 0.5)
        return jax.random.uniform(k, (out_f,), jnp.float32, -bound, bound)

    H = hidden_size
    ones = jnp.ones((H,), jnp.float32)
    zeros = jnp.zeros((H,), jnp.float32)
    return dict(
        w1=kaiming(k1, H, input_size), b1=linear_bias(kb1, input_size, H),
        g1=ones, beta1=zeros, m1=zeros, v1=ones,          # BatchNorm1d(H)
        w2=kaiming(k2, H, H), b2=linear_bias(kb2, H, H),
        g2=ones, beta2=zeros, m2=zeros, v2=ones,
        w3=kaiming(k3, 1, H), b3=linear_bias(kb3, H, 1),
        w4=jax.random.uniform(k4, (1,), jnp.float32, 1.4, 1.40000001),
    )


def s_net_forward(x, params, input_size, compute_dtype=jnp.bfloat16):
    xf = x.reshape(-1, input_size).astype(jnp.float32)   # x.view(-1, input_size)
    n = xf.shape[0]
    H = params["w1"].shape[0]

    devs = jax.devices()
    kind = devs[0].device_kind.lower() if devs else ""
    TM = _pick_tm(n, kind)
    n_pad = _round_up(n, TM)

    # x^T, zero-padded along the batch (lane) dimension; streamed in the
    # compute dtype (bf16 halves the dominant HBM read).
    xt = jnp.pad(xf, ((0, n_pad - n), (0, 0))).T.astype(compute_dtype)  # (IN, n_pad)

    # ---- Host-side constant folding (one-time O(H^2) work) -------------------
    # 1) BatchNorm running stats + Linear bias into W/b.
    s1 = params["g1"] * jax.lax.rsqrt(params["v1"] + BN_EPS)
    s2 = params["g2"] * jax.lax.rsqrt(params["v2"] + BN_EPS)
    w1f = params["w1"] * s1[:, None]                       # (H, IN)
    w2f = params["w2"] * s2[:, None]                       # (H, H)
    b1f = (params["b1"] - params["m1"]) * s1 + params["beta1"]
    b2f = (params["b2"] - params["m2"]) * s2 + params["beta2"]
    # 2) Sigmoid affine: sigmoid(z) = 0.5*(tanh(0.5 z) + 1).  Fold the 0.5 into
    #    each layer's weights and push the "+1" of each sigmoid into the next
    #    layer's bias, so the kernel only runs tanh.
    a1 = 0.5 * w1f                                         # t1 = tanh(a1 x + c1)
    c1 = 0.5 * b1f
    a2 = 0.25 * w2f                                        # t2 = tanh(a2 t1 + c2)
    c2 = 0.25 * jnp.sum(w2f, axis=1) + 0.5 * b2f
    w3p = 0.5 * params["w3"][0]                            # S = exp(w3'.t2 + b3')
    b3p = params["b3"][0] + 0.5 * jnp.sum(params["w3"][0])

    vec = jnp.stack(
        [c1, c2, w3p, jnp.full((H,), b3p, jnp.float32)], axis=1)  # (H, 4) f32

    grid = (n_pad // TM,)
    s_lane = pl.pallas_call(
        s_net_kernel,
        out_shape=jax.ShapeDtypeStruct((1, n_pad), jnp.float32),
        grid=grid,
        in_specs=[
            # x^T tile, pipelined/double-buffered.  (pipeline_mode=pl.Buffered(3)
            # is a possible sweep if profiling shows exposed DMA.)
            pl.BlockSpec((input_size, TM), lambda i: (0, i)),
            pl.BlockSpec((H, input_size), lambda i: (0, 0)),   # A1, VMEM-resident
            pl.BlockSpec((H, H), lambda i: (0, 0)),            # A2, VMEM-resident
            pl.BlockSpec((H, 4), lambda i: (0, 0)),            # packed c1|c2|w3'|b3'
        ],
        out_specs=pl.BlockSpec((1, TM), lambda i: (0, i)),     # lane-dense output
        compiler_params=pltpu.CompilerParams(
            dimension_semantics=("parallel",)),                # v7x: 2 TCs split batch
    )(xt, a1.astype(compute_dtype), a2.astype(compute_dtype), vec)

    S = s_lane[0, :n].reshape(n, 1)
    # phi = (l4(ones(1)))**2 ; l4 = nn.Linear(1, 1, bias=False) so no bias term.
    phi = jnp.square(params["w4"] * jnp.ones((1,), jnp.float32))
    return [S, phi]


def s_net_ref(x, params, input_size):
    """Pure-JAX reference (unfused, PyTorch-equivalent eval-mode math)."""
    h = x.reshape(-1, input_size).astype(jnp.float32)
    h = h @ params["w1"].T + params["b1"]
    h = (h - params["m1"]) / jnp.sqrt(params["v1"] + BN_EPS) * params["g1"] + params["beta1"]
    h = jax.nn.sigmoid(h)
    h = h @ params["w2"].T + params["b2"]
    h = (h - params["m2"]) / jnp.sqrt(params["v2"] + BN_EPS) * params["g2"] + params["beta2"]
    h = jax.nn.sigmoid(h)
    return jnp.exp(h @ params["w3"].T + params["b3"])


if __name__ == "__main__":
    INPUT_SIZE = 32
    HIDDEN = 32

    key = jax.random.PRNGKey(0)
    kx, kp = jax.random.split(key)
    # x of shape (2, 4, 32) -> view(-1, input_size) gives batch 8.
    x = jax.random.normal(kx, (2, 4, INPUT_SIZE), jnp.float32)
    params = init_params(kp, INPUT_SIZE, HIDDEN)

    S_ref = s_net_ref(x, params, INPUT_SIZE)

    # f32 compute path: validates the BN/bias/sigmoid-affine folding exactly.
    S32, phi = s_net_forward(x, params, INPUT_SIZE, compute_dtype=jnp.float32)
    jax.block_until_ready(S32)
    jax.block_until_ready(phi)
    assert S32.shape == (8, 1) and phi.shape == (1,)
    assert jnp.allclose(S32, S_ref, rtol=1e-4, atol=1e-5), \
        float(jnp.max(jnp.abs(S32 - S_ref)))

    # bf16 fast path (default): bf16 HBM stream / MXU / EUP, f32 accumulation.
    Sbf, phi_bf = s_net_forward(x, params, INPUT_SIZE)
    jax.block_until_ready(Sbf)
    jax.block_until_ready(phi_bf)
    assert Sbf.shape == (8, 1)
    assert jnp.allclose(Sbf, S_ref, rtol=3e-2, atol=1e-3), \
        float(jnp.max(jnp.abs(Sbf - S_ref)))

    assert jnp.allclose(phi, jnp.square(params["w4"]), rtol=1e-6, atol=1e-6)
    print("KERNEL_OK")
</pallas_src>

<mosaic_0001>
module attributes {stable_mosaic.version = 11 : i64} {
  func.func @s_net_kernel(%arg0: i32, %arg1: memref<32x128xf32, #tpu.memory_space<vmem>>, %arg2: memref<32x32xf32, #tpu.memory_space<vmem>>, %arg3: memref<32x32xf32, #tpu.memory_space<vmem>>, %arg4: memref<32x4xf32, #tpu.memory_space<vmem>>, %arg5: memref<1x128xf32, #tpu.memory_space<vmem>>) attributes {dimension_semantics = [#tpu.dimension_semantics<parallel>], iteration_bounds = array<i64: 1>, scalar_prefetch = 0 : i64, scratch_operands = 0 : i64, tpu.core_type = #tpu.core_type<tc>, window_params = [{transform_indices = @transform_0, window_bounds = array<i64: 32, 128>}, {pipeline_mode = #tpu.pipeline_mode<synchronous>, transform_indices = @transform_1, window_bounds = array<i64: 32, 32>}, {pipeline_mode = #tpu.pipeline_mode<synchronous>, transform_indices = @transform_2, window_bounds = array<i64: 32, 32>}, {pipeline_mode = #tpu.pipeline_mode<synchronous>, transform_indices = @transform_3, window_bounds = array<i64: 32, 4>}, {transform_indices = @transform_4, window_bounds = array<i64: 1, 128>}]} {
    %c0 = arith.constant 0 : index
    %c0_0 = arith.constant 0 : index
    %0 = vector.load %arg4[%c0, %c0_0] : memref<32x4xf32, #tpu.memory_space<vmem>>, vector<32x1xf32>
    %c0_1 = arith.constant 0 : index
    %c1 = arith.constant 1 : index
    %1 = vector.load %arg4[%c0_1, %c1] : memref<32x4xf32, #tpu.memory_space<vmem>>, vector<32x1xf32>
    %c0_2 = arith.constant 0 : index
    %c2 = arith.constant 2 : index
    %2 = vector.load %arg4[%c0_2, %c2] : memref<32x4xf32, #tpu.memory_space<vmem>>, vector<32x1xf32>
    %c0_3 = arith.constant 0 : index
    %c3 = arith.constant 3 : index
    %3 = vector.load %arg4[%c0_3, %c3] : memref<32x4xf32, #tpu.memory_space<vmem>>, vector<1x1xf32>
    %c0_4 = arith.constant 0 : index
    %c0_5 = arith.constant 0 : index
    %4 = vector.load %arg2[%c0_4, %c0_5] : memref<32x32xf32, #tpu.memory_space<vmem>>, vector<32x32xf32>
    %c0_6 = arith.constant 0 : index
    %c0_7 = arith.constant 0 : index
    %5 = vector.load %arg1[%c0_6, %c0_7] : memref<32x128xf32, #tpu.memory_space<vmem>>, vector<32x128xf32>
    %cst = arith.constant dense<0.000000e+00> : vector<32x128xf32>
    %6 = tpu.matmul %4, %5, %cst {dimension_numbers = #tpu.dot_dimension_numbers<[1], [0], [0], [1], [0, 0, 1, 1], [], []>} : vector<32x32xf32>, vector<32x128xf32>, vector<32x128xf32> -> vector<32x128xf32>
    %7 = vector.broadcast %0 : vector<32x1xf32> to vector<32x128xf32>
    %8 = arith.addf %6, %7 : vector<32x128xf32>
    %9 = math.tanh %8 : vector<32x128xf32>
    %c0_8 = arith.constant 0 : index
    %c0_9 = arith.constant 0 : index
    %10 = vector.load %arg3[%c0_8, %c0_9] : memref<32x32xf32, #tpu.memory_space<vmem>>, vector<32x32xf32>
    %cst_10 = arith.constant dense<0.000000e+00> : vector<32x128xf32>
    %11 = tpu.matmul %10, %9, %cst_10 {dimension_numbers = #tpu.dot_dimension_numbers<[1], [0], [0], [1], [0, 0, 1, 1], [], []>} : vector<32x32xf32>, vector<32x128xf32>, vector<32x128xf32> -> vector<32x128xf32>
    %12 = vector.broadcast %1 : vector<32x1xf32> to vector<32x128xf32>
    %13 = arith.addf %11, %12 : vector<32x128xf32>
    %14 = math.tanh %13 : vector<32x128xf32>
    %15 = vector.broadcast %2 : vector<32x1xf32> to vector<32x128xf32>
    %16 = arith.mulf %14, %15 : vector<32x128xf32>
    %cst_11 = arith.constant dense<0.000000e+00> : vector<128xf32>
    %17 = vector.multi_reduction <add>, %16, %cst_11 [0] : vector<32x128xf32> to vector<128xf32>
    %18 = vector.shape_cast %17 : vector<128xf32> to vector<1x128xf32>
    %19 = vector.broadcast %3 : vector<1x1xf32> to vector<1x128xf32>
    %20 = arith.addf %18, %19 : vector<1x128xf32>
    %21 = math.exp %20 : vector<1x128xf32>
    %c0_12 = arith.constant 0 : index
    %c0_13 = arith.constant 0 : index
    %22 = vector.load %arg5[%c0_12, %c0_13] : memref<1x128xf32, #tpu.memory_space<vmem>>, vector<1x128xf32>
    tpu.vector_store %arg5[%c0_12, %c0_13], %21 {strides = array<i32>} : memref<1x128xf32, #tpu.memory_space<vmem>>, vector<1x128xf32>,
    return
  }
  func.func @transform_0(%arg0: i32) -> (i32, i32) {
    %c0_i32 = arith.constant 0 : i32
    %c0_i32_0 = arith.constant 0 : i32
    return %c0_i32, %arg0 : i32, i32
  }
  func.func @transform_1(%arg0: i32) -> (i32, i32) {
    %c0_i32 = arith.constant 0 : i32
    %c0_i32_0 = arith.constant 0 : i32
    %c0_i32_1 = arith.constant 0 : i32
    return %c0_i32, %c0_i32_0 : i32, i32
  }
  func.func @transform_2(%arg0: i32) -> (i32, i32) {
    %c0_i32 = arith.constant 0 : i32
    %c0_i32_0 = arith.constant 0 : i32
    %c0_i32_1 = arith.constant 0 : i32
    return %c0_i32, %c0_i32_0 : i32, i32
  }
  func.func @transform_3(%arg0: i32) -> (i32, i32) {
    %c0_i32 = arith.constant 0 : i32
    %c0_i32_0 = arith.constant 0 : i32
    %c0_i32_1 = arith.constant 0 : i32
    return %c0_i32, %c0_i32_0 : i32, i32
  }
  func.func @transform_4(%arg0: i32) -> (i32, i32) {
    %c0_i32 = arith.constant 0 : i32
    %c0_i32_0 = arith.constant 0 : i32
    return %c0_i32, %arg0 : i32, i32
  }
}

</mosaic_0001>

<llo_original>
// kernel: tpu_custom_call.1
$region0: #{tpu_custom_call.1}
  #allocation0 [shape = 'u32[]', space=smem, size = 0x4, offset = 0x4, fixed_abs, tag = 'smem constant byte address 0x4 - core index']
  #allocation1 [shape = 'u32[144,128]{1,0:T(1,128)}', space=vmem, size = 0x12000, scoped, tag = 'internal scratch']
  %s0 = inlined_call_operand.vmem [shape: f32[32,128], index: 0, kind: input, shape index: {}]
  %s1 = inlined_call_operand.hbm [shape: f32[32,32], index: 1, kind: input, shape index: {}]
  %s2 = inlined_call_operand.hbm [shape: f32[32,32], index: 2, kind: input, shape index: {}]
  %s3 = inlined_call_operand.vmem [shape: f32[32,4], index: 3, kind: input, shape index: {}]
  %s4 = inlined_call_operand.hbm [shape: f32[1,128], index: 4, kind: output, shape index: {}]
  %s5 = sld [smem:[#allocation0]]
  $region34: #{tpu_custom_call.1} parent=0
    _
  %s7 = ssub.s32 1, %s5
  %s8 = scalar_select 0, %s7, %s5
  $region1: #{tpu_custom_call.1} parent=0
    #allocation2 [shape = 'u8[16384]{0}', space=vmem, size = 0x4000, scoped, tag = 'input window, operand 1, single buffered']
    #allocation3 [shape = 's32[1]{0}', space=sflag, size = 0x4, scoped, tag = 'scoped memory for tpu_custom_call.1']
    #allocation4 [shape = 's32[1]{0}', space=sflag, size = 0x4, scoped, tag = 'scoped memory for tpu_custom_call.1']
    #allocation5 [shape = 'u8[16384]{0}', space=vmem, size = 0x4000, scoped, tag = 'input window, operand 2, single buffered']
    #allocation6 [shape = 's32[1]{0}', space=sflag, size = 0x4, scoped, tag = 'scoped memory for tpu_custom_call.1']
    #allocation7 [shape = 'u8[512]{0}', space=vmem, size = 0x400, scoped, tag = 'output window, operand 0, single buffered']
    %9 = vsyncpa [#allocation3], 0
    %10 = vsyncpa [#allocation6], 0
    %11 = vsyncpa [#allocation4], 0
    // Predicated region
    $region2: #{tpu_custom_call.1} parent=1 // pred_check
      _
    $region3: #{tpu_custom_call.1} parent=1 // pred_check_branch
      %13 = sbr.rel (0) target = $region5
    $region4: #{tpu_custom_call.1} parent=1 // pred_region
      _
    $region5: #{tpu_custom_call.1} parent=1 // pred_fallthru
      _
    // Predicated region
    $region6: #{tpu_custom_call.1} parent=1 // pred_check
      _
    $region7: #{tpu_custom_call.1} parent=1 // pred_check_branch
      %15 = sbr.rel (0) target = $region9
    $region8: #{tpu_custom_call.1} parent=1 // pred_region
      %s17 = ssub.s32 512, 512
      %18 = vsyncadd [#allocation3], %s17
      %s19 = sshll.u32 [#allocation2], 4
      %s20 = int_to_ptr.vmem [resolvable:$true] %s19
      %25 = dma.hbm_to_vmem [thread:$0]  %s1, 512, %s20, [#allocation3], 128, 128, 8
    $region9: #{tpu_custom_call.1} parent=1 // pred_fallthru
      _
    // Predicated region
    $region10: #{tpu_custom_call.1} parent=1 // pred_check
      _
    $region11: #{tpu_custom_call.1} parent=1 // pred_check_branch
      %27 = sbr.rel (0) target = $region13
    $region12: #{tpu_custom_call.1} parent=1 // pred_region
      %s29 = ssub.s32 512, 512
      %30 = vsyncadd [#allocation6], %s29
      %s31 = sshll.u32 [#allocation5], 4
      %s32 = int_to_ptr.vmem [resolvable:$true] %s31
      %37 = dma.hbm_to_vmem [thread:$0]  %s2, 512, %s32, [#allocation6], 128, 128, 8
    $region13: #{tpu_custom_call.1} parent=1 // pred_fallthru
      _
    // Predicated region
    $region14: #{tpu_custom_call.1} parent=1 // pred_check
      _
    $region15: #{tpu_custom_call.1} parent=1 // pred_check_branch
      %39 = sbr.rel (0) target = $region17
    $region16: #{tpu_custom_call.1} parent=1 // pred_region
      _
    $region17: #{tpu_custom_call.1} parent=1 // pred_fallthru
      _
    // Predicated region
    $region18: #{tpu_custom_call.1} parent=1 // pred_check
      _
    $region19: #{tpu_custom_call.1} parent=1 // pred_check_branch
      %41 = sbr.rel (0) target = $region21
    $region20: #{tpu_custom_call.1} parent=1 // pred_region
      %42 = dma.done [#allocation3], 512
    $region21: #{tpu_custom_call.1} parent=1 // pred_fallthru
      _
    // Predicated region
    $region22: #{tpu_custom_call.1} parent=1 // pred_check
      _
    $region23: #{tpu_custom_call.1} parent=1 // pred_check_branch
      %44 = sbr.rel (0) target = $region25
    $region24: #{tpu_custom_call.1} parent=1 // pred_region
      %45 = dma.done [#allocation6], 512
    $region25: #{tpu_custom_call.1} parent=1 // pred_fallthru
      _
    %v46 = vld [vmem:[%s3] sm:$0xff]
    %v47 = vld [vmem:[%s3 + $0x8] sm:$0xff]
    %v48 = vld [vmem:[%s3 + $0x10] sm:$0xff]
    %v49 = vld [vmem:[%s3 + $0x18] sm:$0xff]
    %v50 = vld [vmem:[%s3] sm:$0x1]
    %v51 = vld [vmem:[#allocation2] sm:$0xff]
    %v52 = vld [vmem:[#allocation2 + $0x8] sm:$0xff]
    %v53 = vld [vmem:[#allocation2 + $0x10] sm:$0xff]
    %v54 = vld [vmem:[#allocation2 + $0x18] sm:$0xff]
    %v55 = vld [vmem:[%s0] sm:$0xff]
    %v56 = vld [vmem:[%s0 + $0x8] sm:$0xff]
    %v57 = vld [vmem:[%s0 + $0x10] sm:$0xff]
    %v58 = vld [vmem:[%s0 + $0x18] sm:$0xff]
    %60 = vset.pattern.permute.xlu0 0
    %61 = vperm.xlu0 %60, %v46
    %v62 = vpop.permute.xlu0 %61
    %65 = vset.pattern.permute.xlu0 0
    %66 = vperm.xlu0 %65, %v47
    %v67 = vpop.permute.xlu0 %66
    %70 = vset.pattern.permute.xlu0 0
    %71 = vperm.xlu0 %70, %v48
    %v72 = vpop.permute.xlu0 %71
    %75 = vset.pattern.permute.xlu0 0
    %76 = vperm.xlu0 %75, %v49
    %v77 = vpop.permute.xlu0 %76
    %vm79 = vcmask 261120
    %v81 = vsel %vm79, %v51, 0
    %v84 = vsel %vm79, %v52, 0
    %v87 = vsel %vm79, %v53, 0
    %v90 = vsel %vm79, %v54, 0
    %92 = vmatprep.subr.mxu0 0.0
    %93 = vmatpush1.msra.mxu0 0.0
    %94 = vmatprep.subr.mxu0 0.0
    %95 = vmatpush1.msra.mxu0 0.0
    %96 = vmatprep.subr.mxu0 0.0
    %97 = vmatpush1.msra.mxu0 0.0
    %98 = vmatprep.subr.mxu0 0.0
    %99 = vmatpush1.msra.mxu0 0.0
    %100 = vmatprep.subr.mxu0 0.0
    %101 = vmatpush1.msra.mxu0 0.0
    %102 = vmatprep.subr.mxu0 0.0
    %103 = vmatpush1.msra.mxu0 0.0
    %104 = vmatprep.subr.mxu0 0.0
    %105 = vmatpush1.msra.mxu0 0.0
    %106 = vmatprep.subr.mxu0 0.0
    %107 = vmatpush1.msra.mxu0 0.0
    %108 = vmatprep.subr.mxu0 0.0
    %109 = vmatpush1.msra.mxu0 0.0
    %110 = vmatprep.subr.mxu0 0.0
    %111 = vmatpush1.msra.mxu0 0.0
    %112 = vmatprep.subr.mxu0 0.0
    %113 = vmatpush1.msra.mxu0 0.0
    %114 = vmatprep.subr.mxu0 0.0
    %115 = vmatpush1.msra.mxu0 0.0
    %116 = vmatprep.subr.mxu0 0.0
    %117 = vmatpush1.msra.mxu0 %v58
    %118 = vmatprep.subr.mxu0 0.0
    %119 = vmatpush1.msra.mxu0 %v57
    %120 = vmatprep.subr.mxu0 0.0
    %121 = vmatpush1.msra.mxu0 %v56
    %122 = vmatprep.subr.mxu0 0.0
    %123 = vmatpush1.msra.mxu0 %v55
    %124 = vmatprep.subr.mxu0 0.0
    %125 = vmatpush2.msra.mxu0 0.0
    %126 = vmatprep.subr.mxu0 0.0
    %127 = vmatpush2.msra.mxu0 0.0
    %128 = vmatprep.subr.mxu0 0.0
    %129 = vmatpush2.msra.mxu0 0.0
    %130 = vmatprep.subr.mxu0 0.0
    %131 = vmatpush2.msra.mxu0 0.0
    %132 = vmatprep.subr.mxu0 0.0
    %133 = vmatpush2.msra.mxu0 0.0
    %134 = vmatprep.subr.mxu0 0.0
    %135 = vmatpush2.msra.mxu0 0.0
    %136 = vmatprep.subr.mxu0 0.0
    %137 = vmatpush2.msra.mxu0 0.0
    %138 = vmatprep.subr.mxu0 0.0
    %139 = vmatpush2.msra.mxu0 0.0
    %140 = vmatprep.subr.mxu0 0.0
    %141 = vmatpush2.msra.mxu0 0.0
    %142 = vmatprep.subr.mxu0 0.0
    %143 = vmatpush2.msra.mxu0 0.0
    %144 = vmatprep.subr.mxu0 0.0
    %145 = vmatpush2.msra.mxu0 0.0
    %146 = vmatprep.subr.mxu0 0.0
    %147 = vmatpush2.msra.mxu0 0.0
    %148 = vmatprep.subr.mxu0 0.0
    %149 = vmatpush2.msra.mxu0 0.0
    %150 = vmatprep.subr.mxu0 0.0
    %151 = vmatpush2.msra.mxu0 0.0
    %152 = vmatprep.subr.mxu0 0.0
    %153 = vmatpush2.msra.mxu0 0.0
    %154 = vmatprep.subr.mxu0 0.0
    %155 = vmatpush2.msra.mxu0 0.0
    %156 = vmatprep.mubr.f32.mxu0 0.0
    %157 = vmatmul.mubr.f32.gmra.mxu0 %v81
    %v158 = vpop.f32.mrf.mxu0
    %v159 = vadd.f32 %v62, %v158
    %v160 = vpop.f32.mrf.mxu0
    %161 = vmatprep.mubr.f32.mxu0 0.0
    %162 = vmatmul.mubr.f32.gmra.mxu0 %v84
    %v163 = vpop.f32.mrf.mxu0
    %v164 = vadd.f32 %v67, %v163
    %v165 = vpop.f32.mrf.mxu0
    %166 = vmatprep.mubr.f32.mxu0 0.0
    %167 = vmatmul.mubr.f32.gmra.mxu0 %v87
    %v168 = vpop.f32.mrf.mxu0
    %v169 = vadd.f32 %v72, %v168
    %v170 = vpop.f32.mrf.mxu0
    %171 = vmatprep.mubr.f32.mxu0 0.0
    %172 = vmatmul.mubr.f32.gmra.mxu0 %v90
    %v173 = vpop.f32.mrf.mxu0
    %v174 = vadd.f32 %v77, %v173
    %v175 = vpop.f32.mrf.mxu0
    %176 = vdwg.mxu0
    %v177 = vtanh.pop %v159
    %v178 = vtanh.pop %v164
    %v179 = vtanh.pop %v169
    %v180 = vtanh.pop %v174
    %v181 = vld [vmem:[#allocation5] sm:$0xff]
    %v182 = vld [vmem:[#allocation5 + $0x8] sm:$0xff]
    %v183 = vld [vmem:[#allocation5 + $0x10] sm:$0xff]
    %v184 = vld [vmem:[#allocation5 + $0x18] sm:$0xff]
    %185 = vset.pattern.permute.xlu0 1
    %186 = vperm.xlu0 %185, %v46
    %v187 = vpop.permute.xlu0 %186
    %189 = vset.pattern.permute.xlu0 1
    %190 = vperm.xlu0 %189, %v47
    %v191 = vpop.permute.xlu0 %190
    %193 = vset.pattern.permute.xlu0 1
    %194 = vperm.xlu0 %193, %v48
    %v195 = vpop.permute.xlu0 %194
    %197 = vset.pattern.permute.xlu0 1
    %198 = vperm.xlu0 %197, %v49
    %v199 = vpop.permute.xlu0 %198
    %v202 = vsel %vm79, %v181, 0
    %v205 = vsel %vm79, %v182, 0
    %v208 = vsel %vm79, %v183, 0
    %v211 = vsel %vm79, %v184, 0
    %213 = vmatprep.subr.mxu0 0.0
    %214 = vmatpush1.msra.mxu0 0.0
    %215 = vmatprep.subr.mxu0 0.0
    %216 = vmatpush1.msra.mxu0 0.0
    %217 = vmatprep.subr.mxu0 0.0
    %218 = vmatpush1.msra.mxu0 0.0
    %219 = vmatprep.subr.mxu0 0.0
    %220 = vmatpush1.msra.mxu0 0.0
    %221 = vmatprep.subr.mxu0 0.0
    %222 = vmatpush1.msra.mxu0 0.0
    %223 = vmatprep.subr.mxu0 0.0
    %224 = vmatpush1.msra.mxu0 0.0
    %225 = vmatprep.subr.mxu0 0.0
    %226 = vmatpush1.msra.mxu0 0.0
    %227 = vmatprep.subr.mxu0 0.0
    %228 = vmatpush1.msra.mxu0 0.0
    %229 = vmatprep.subr.mxu0 0.0
    %230 = vmatpush1.msra.mxu0 0.0
    %231 = vmatprep.subr.mxu0 0.0
    %232 = vmatpush1.msra.mxu0 0.0
    %233 = vmatprep.subr.mxu0 0.0
    %234 = vmatpush1.msra.mxu0 0.0
    %235 = vmatprep.subr.mxu0 0.0
    %236 = vmatpush1.msra.mxu0 0.0
    %237 = vmatprep.subr.mxu0 0.0
    %238 = vmatpush1.msra.mxu0 %v180
    %239 = vmatprep.subr.mxu0 0.0
    %240 = vmatpush1.msra.mxu0 %v179
    %241 = vmatprep.subr.mxu0 0.0
    %242 = vmatpush1.msra.mxu0 %v178
    %243 = vmatprep.subr.mxu0 0.0
    %244 = vmatpush1.msra.mxu0 %v177
    %245 = vmatprep.subr.mxu0 0.0
    %246 = vmatpush2.msra.mxu0 0.0
    %247 = vmatprep.subr.mxu0 0.0
    %248 = vmatpush2.msra.mxu0 0.0
    %249 = vmatprep.subr.mxu0 0.0
    %250 = vmatpush2.msra.mxu0 0.0
    %251 = vmatprep.subr.mxu0 0.0
    %252 = vmatpush2.msra.mxu0 0.0
    %253 = vmatprep.subr.mxu0 0.0
    %254 = vmatpush2.msra.mxu0 0.0
    %255 = vmatprep.subr.mxu0 0.0
    %256 = vmatpush2.msra.mxu0 0.0
    %257 = vmatprep.subr.mxu0 0.0
    %258 = vmatpush2.msra.mxu0 0.0
    %259 = vmatprep.subr.mxu0 0.0
    %260 = vmatpush2.msra.mxu0 0.0
    %261 = vmatprep.subr.mxu0 0.0
    %262 = vmatpush2.msra.mxu0 0.0
    %263 = vmatprep.subr.mxu0 0.0
    %264 = vmatpush2.msra.mxu0 0.0
    %265 = vmatprep.subr.mxu0 0.0
    %266 = vmatpush2.msra.mxu0 0.0
    %267 = vmatprep.subr.mxu0 0.0
    %268 = vmatpush2.msra.mxu0 0.0
    %269 = vmatprep.subr.mxu0 0.0
    %270 = vmatpush2.msra.mxu0 0.0
    %271 = vmatprep.subr.mxu0 0.0
    %272 = vmatpush2.msra.mxu0 0.0
    %273 = vmatprep.subr.mxu0 0.0
    %274 = vmatpush2.msra.mxu0 0.0
    %275 = vmatprep.subr.mxu0 0.0
    %276 = vmatpush2.msra.mxu0 0.0
    %277 = vmatprep.mubr.f32.mxu0 0.0
    %278 = vmatmul.mubr.f32.gmra.mxu0 %v202
    %v279 = vpop.f32.mrf.mxu0
    %v280 = vadd.f32 %v187, %v279
    %v281 = vpop.f32.mrf.mxu0
    %282 = vmatprep.mubr.f32.mxu0 0.0
    %283 = vmatmul.mubr.f32.gmra.mxu0 %v205
    %v284 = vpop.f32.mrf.mxu0
    %v285 = vadd.f32 %v191, %v284
    %v286 = vpop.f32.mrf.mxu0
    %287 = vmatprep.mubr.f32.mxu0 0.0
    %288 = vmatmul.mubr.f32.gmra.mxu0 %v208
    %v289 = vpop.f32.mrf.mxu0
    %v290 = vadd.f32 %v195, %v289
    %v291 = vpop.f32.mrf.mxu0
    %292 = vmatprep.mubr.f32.mxu0 0.0
    %293 = vmatmul.mubr.f32.gmra.mxu0 %v211
    %v294 = vpop.f32.mrf.mxu0
    %v295 = vadd.f32 %v199, %v294
    %v296 = vpop.f32.mrf.mxu0
    %297 = vdwg.mxu0
    %v298 = vtanh.pop %v280
    %v299 = vtanh.pop %v285
    %v300 = vtanh.pop %v290
    %v301 = vtanh.pop %v295
    %302 = vset.pattern.permute.xlu0 2
    %303 = vperm.xlu0 %302, %v46
    %v304 = vpop.permute.xlu0 %303
    %306 = vset.pattern.permute.xlu0 2
    %307 = vperm.xlu0 %306, %v47
    %v308 = vpop.permute.xlu0 %307
    %310 = vset.pattern.permute.xlu0 2
    %311 = vperm.xlu0 %310, %v48
    %v312 = vpop.permute.xlu0 %311
    %314 = vset.pattern.permute.xlu0 2
    %315 = vperm.xlu0 %314, %v49
    %v316 = vpop.permute.xlu0 %315
    %v318 = vmul.f32 %v298, %v304
    %v319 = vmul.f32 %v299, %v308
    %v320 = vmul.f32 %v300, %v312
    %v321 = vmul.f32 %v301, %v316
    %v322 = vadd.f32 %v318, %v319
    %v323 = vadd.f32 %v322, %v320
    %v324 = vadd.f32 %v323, %v321
    %v325 = vrot.slane %v324, 4
    %v326 = vadd.f32 %v324, %v325
    %v327 = vrot.slane %v326, 2
    %v328 = vadd.f32 %v326, %v327
    %v329 = vrot.slane %v328, 1
    %v330 = vadd.f32 %v328, %v329
    %332 = vset.pattern.permute.xlu0 3
    %333 = vperm.xlu0 %332, %v50
    %v334 = vpop.permute.xlu0 %333
    %v336 = vadd.f32 %v330, %v334
    %v337 = vmul.f32 %v336, 1.442695
    %v338 = vpow.pop %v337
    %339 = vst [vmem:[#allocation7] sm:$0x1] %v338
    // Predicated region
    $region26: #{tpu_custom_call.1} parent=1 // pred_check
      _
    $region27: #{tpu_custom_call.1} parent=1 // pred_check_branch
      %341 = sbr.rel (0) target = $region29
    $region28: #{tpu_custom_call.1} parent=1 // pred_region
      %s343 = ssub.s32 16, 16
      %344 = vsyncadd [#allocation4], %s343
      %s346 = sshll.u32 [#allocation7], 4
      %s347 = int_to_ptr.vmem [resolvable:$true] %s346
      %349 = dma.vmem_to_hbm [thread:$0]  %s347, 16, %s4, [#allocation4]
    $region29: #{tpu_custom_call.1} parent=1 // pred_fallthru
      _
    // Predicated region
    $region30: #{tpu_custom_call.1} parent=1 // pred_check
      _
    $region31: #{tpu_custom_call.1} parent=1 // pred_check_branch
      %351 = sbr.rel (0) target = $region33
    $region32: #{tpu_custom_call.1} parent=1 // pred_region
      %352 = dma.done [#allocation4], 16
    $region33: #{tpu_custom_call.1} parent=1 // pred_fallthru
      _
    %353 = vsyncpa [#allocation3], 1
    %354 = vsyncpa [#allocation6], 1
    %355 = vsyncpa [#allocation4], 1

</llo_original>
